<compile_context>
chip_gen: v7x
topology: tpu7x:2x2x1
jax: 0.10.0
libtpu: 0.0.40
codegen_flags: <defaults>
</compile_context>

<pallas_src>
import jax
import jax.numpy as jnp
from jax.experimental import pallas as pl
from jax.experimental.pallas import tpu as pltpu

_ROW_LEN_CAP = 32768                    # widest lane-dense row (multiple of 128)
_TARGET_BLOCK_BYTES = 4 * 1024 * 1024   # ~4 MiB/block -> 4 buffers = 16 MiB VMEM
_VMEM_LIMIT_BYTES = 32 * 1024 * 1024    # raises v5e's 16 MiB default, fits v7x


def _copy_kernel(x_ref, o_ref):
    # Identity copy of the current tile (the whole "compute" of a reshape).
    o_ref[...] = x_ref[...]


def _choose_tiling(total, itemsize):
    """Pick (n_rows, row_len, tile_rows) for a lane-dense 2-D copy.

    row_len  : widest multiple of 128 that divides `total` (<= _ROW_LEN_CAP),
               so output stores are wide, unmasked vst.
    tile_rows: dtype-aware multiple of the sublane pack, sized so one block is
               ~_TARGET_BLOCK_BYTES and divides n_rows exactly.
    Returns None if no reasonable Pallas tiling exists (caller falls back to
    the zero-cost metadata reshape).
    """
    row_len = 128
    while total % (row_len * 2) == 0 and row_len * 2 <= _ROW_LEN_CAP:
        row_len *= 2
    n_rows = total // row_len

    # sublane packing: 8 rows/vreg for 32-bit, 16 for 16-bit, 32 for 8-bit
    sub = 8 * max(1, 4 // itemsize)

    max_rows_by_bytes = max(1, _TARGET_BLOCK_BYTES // (row_len * itemsize))
    limit = min(n_rows, max_rows_by_bytes)

    tile_rows = 0
    t = sub
    while t <= limit:
        if n_rows % t == 0:
            tile_rows = t
        t += sub

    if tile_rows == 0:
        # No sublane-aligned divisor under the budget.  If the whole array is
        # small, a single full-extent block is fine (block dims equal to the
        # full array dims are always legal); otherwise bail out.
        if n_rows * row_len * itemsize <= 2 * _TARGET_BLOCK_BYTES:
            tile_rows = n_rows
        else:
            return None
    return n_rows, row_len, tile_rows


def _pallas_copy_2d(x2d, tile_rows):
    """Tiled VMEM identity copy of a 2-D row-major slab via pallas_call."""
    n_rows, row_len = x2d.shape
    grid = (n_rows // tile_rows,)
    return pl.pallas_call(
        _copy_kernel,
        out_shape=jax.ShapeDtypeStruct((n_rows, row_len), x2d.dtype),
        grid_spec=pltpu.PrefetchScalarGridSpec(
            num_scalar_prefetch=0,
            grid=grid,
            in_specs=[pl.BlockSpec((tile_rows, row_len), lambda i: (i, 0))],
            out_specs=pl.BlockSpec((tile_rows, row_len), lambda i: (i, 0)),
        ),
        compiler_params=pltpu.CompilerParams(
            dimension_semantics=("parallel",),   # megacore / v7x 2-TC sharding
            vmem_limit_bytes=_VMEM_LIMIT_BYTES,
        ),
    )(x2d)


class ReshapeLayerPallas:
    """JAX/Pallas equivalent of the PyTorch ReshapeLayer (no parameters)."""

    def __init__(self, shape, keep_dim=-1):
        self.shape = tuple(shape)
        self.keep_dim = keep_dim

    def __call__(self, x):
        # Target shape, exactly as torch computes it.
        out_shape = tuple(x.shape[: self.keep_dim]) + self.shape

        total = int(x.size)
        itemsize = jnp.dtype(x.dtype).itemsize

        # A contiguous row-major reshape is metadata-only.  When the flat size
        # is empty / not 128-aligned, or no sensible tiling exists, skip the
        # Pallas copy entirely (fastest possible path, zero HBM traffic).
        if total == 0 or total % 128 != 0:
            return jnp.reshape(x, out_shape)

        tiling = _choose_tiling(total, itemsize)
        if tiling is None:
            return jnp.reshape(x, out_shape)
        n_rows, row_len, tile_rows = tiling

        # --- Pallas hot path: lane-dense identity copy of the raw data ---
        x2d = jnp.reshape(x, (n_rows, row_len))
        y2d = _pallas_copy_2d(x2d, tile_rows)

        # --- glue: reinterpret row-major data in the target shape ---
        return jnp.reshape(y2d, out_shape)


if __name__ == "__main__":
    key = jax.random.PRNGKey(0)
    k0, k1, k2 = jax.random.split(key, 3)

    # 1) Module-shaped example: keep batch+channel, reshape 16x16 -> (8, 32).
    #    torch: ReshapeLayer(shape=(8, 32), keep_dim=-2)
    x = jax.random.normal(k0, (2, 4, 16, 16), dtype=jnp.float32)
    layer = ReshapeLayerPallas(shape=(8, 32), keep_dim=-2)
    out = jax.block_until_ready(layer(x))
    ref = jnp.reshape(x, (2, 4, 8, 32))
    assert out.shape == (2, 4, 8, 32), out.shape
    assert out.dtype == x.dtype
    assert bool(jnp.array_equal(out, ref))

    # 2) Larger input: exercises the multi-block tiled copy path
    #    (row_len=32768, tile_rows=32 -> 4 MiB blocks, grid of 4 parallel steps).
    xl = jax.random.normal(k1, (16, 8, 128, 256), dtype=jnp.float32)
    layer_l = ReshapeLayerPallas(shape=(128 * 256,), keep_dim=-2)
    out_l = jax.block_until_ready(layer_l(xl))
    ref_l = jnp.reshape(xl, (16, 8, 128 * 256))
    assert out_l.shape == (16, 8, 32768), out_l.shape
    assert bool(jnp.array_equal(out_l, ref_l))

    # 3) Non-128-aligned flat size: falls back to the metadata-only reshape.
    xs = jax.random.normal(k2, (2, 3, 5, 7), dtype=jnp.float32)
    layer_s = ReshapeLayerPallas(shape=(35,), keep_dim=-2)
    out_s = jax.block_until_ready(layer_s(xs))
    assert out_s.shape == (2, 3, 35), out_s.shape
    assert bool(jnp.array_equal(out_s, jnp.reshape(xs, (2, 3, 35))))

    print("KERNEL_OK")
</pallas_src>

<mosaic_0001>
module attributes {stable_mosaic.version = 11 : i64} {
  func.func @_copy_kernel(%arg0: i32, %arg1: memref<1x2048xf32, #tpu.memory_space<vmem>>, %arg2: memref<1x2048xf32, #tpu.memory_space<vmem>>) attributes {dimension_semantics = [#tpu.dimension_semantics<parallel>], iteration_bounds = array<i64: 1>, scalar_prefetch = 0 : i64, scratch_operands = 0 : i64, tpu.core_type = #tpu.core_type<tc>, window_params = [{transform_indices = @transform_0, window_bounds = array<i64: 1, 2048>}, {transform_indices = @transform_1, window_bounds = array<i64: 1, 2048>}]} {
    %c0 = arith.constant 0 : index
    %c0_0 = arith.constant 0 : index
    %0 = vector.load %arg1[%c0, %c0_0] : memref<1x2048xf32, #tpu.memory_space<vmem>>, vector<1x2048xf32>
    %c0_1 = arith.constant 0 : index
    %c0_2 = arith.constant 0 : index
    %1 = vector.load %arg2[%c0_1, %c0_2] : memref<1x2048xf32, #tpu.memory_space<vmem>>, vector<1x2048xf32>
    tpu.vector_store %arg2[%c0_1, %c0_2], %0 {strides = array<i32>} : memref<1x2048xf32, #tpu.memory_space<vmem>>, vector<1x2048xf32>,
    return
  }
  func.func @transform_0(%arg0: i32) -> (i32, i32) {
    %c0_i32 = arith.constant 0 : i32
    %c0_i32_0 = arith.constant 0 : i32
    return %arg0, %c0_i32 : i32, i32
  }
  func.func @transform_1(%arg0: i32) -> (i32, i32) {
    %c0_i32 = arith.constant 0 : i32
    %c0_i32_0 = arith.constant 0 : i32
    return %arg0, %c0_i32 : i32, i32
  }
}

</mosaic_0001>

<llo_original>
// kernel: tpu_custom_call.1
$region0: #{tpu_custom_call.1}
  #allocation0 [shape = 'u32[]', space=smem, size = 0x4, offset = 0x4, fixed_abs, tag = 'smem constant byte address 0x4 - core index']
  #allocation1 [shape = 'u32[144,128]{1,0:T(1,128)}', space=vmem, size = 0x12000, scoped, tag = 'internal scratch']
  %s0 = inlined_call_operand.hbm [shape: f32[1,2048], index: 0, kind: input, shape index: {}]
  %s1 = inlined_call_operand.hbm [shape: f32[1,2048], index: 1, kind: output, shape index: {}]
  %s2 = sld [smem:[#allocation0]]
  $region18: #{tpu_custom_call.1} parent=0
    _
  %s4 = ssub.s32 1, %s2
  %s5 = scalar_select 0, %s4, %s2
  $region1: #{tpu_custom_call.1} parent=0
    #allocation2 [shape = 'u8[8192]{0}', space=vmem, size = 0x2000, scoped, tag = 'input window, operand 0, single buffered']
    #allocation3 [shape = 's32[1]{0}', space=sflag, size = 0x4, scoped, tag = 'scoped memory for tpu_custom_call.1']
    #allocation4 [shape = 's32[1]{0}', space=sflag, size = 0x4, scoped, tag = 'scoped memory for tpu_custom_call.1']
    #allocation5 [shape = 'u8[8192]{0}', space=vmem, size = 0x2000, scoped, tag = 'output window, operand 0, single buffered']
    %6 = vsyncpa [#allocation3], 0
    %7 = vsyncpa [#allocation4], 0
    // Predicated region
    $region2: #{tpu_custom_call.1} parent=1 // pred_check
      _
    $region3: #{tpu_custom_call.1} parent=1 // pred_check_branch
      %9 = sbr.rel (0) target = $region5
    $region4: #{tpu_custom_call.1} parent=1 // pred_region
      %s11 = ssub.s32 256, 256
      %12 = vsyncadd [#allocation3], %s11
      %s14 = sshll.u32 [#allocation2], 4
      %s15 = int_to_ptr.vmem [resolvable:$true] %s14
      %17 = dma.hbm_to_vmem [thread:$0]  %s0, 256, %s15, [#allocation3]
    $region5: #{tpu_custom_call.1} parent=1 // pred_fallthru
      _
    // Predicated region
    $region6: #{tpu_custom_call.1} parent=1 // pred_check
      _
    $region7: #{tpu_custom_call.1} parent=1 // pred_check_branch
      %19 = sbr.rel (0) target = $region9
    $region8: #{tpu_custom_call.1} parent=1 // pred_region
      %20 = dma.done [#allocation3], 256
    $region9: #{tpu_custom_call.1} parent=1 // pred_fallthru
      _
    %v21 = vld [vmem:[#allocation2] sm:$0xff]
    %v22 = vld [vmem:[#allocation2 + $0x8] sm:$0xff]
    %23 = vst [vmem:[#allocation5] sm:$0xff] %v21
    %24 = vst [vmem:[#allocation5 + $0x8] sm:$0xff] %v22
    // Predicated region
    $region10: #{tpu_custom_call.1} parent=1 // pred_check
      _
    $region11: #{tpu_custom_call.1} parent=1 // pred_check_branch
      %26 = sbr.rel (0) target = $region13
    $region12: #{tpu_custom_call.1} parent=1 // pred_region
      %s28 = ssub.s32 256, 256
      %29 = vsyncadd [#allocation4], %s28
      %s31 = sshll.u32 [#allocation5], 4
      %s32 = int_to_ptr.vmem [resolvable:$true] %s31
      %34 = dma.vmem_to_hbm [thread:$0]  %s32, 256, %s1, [#allocation4]
    $region13: #{tpu_custom_call.1} parent=1 // pred_fallthru
      _
    // Predicated region
    $region14: #{tpu_custom_call.1} parent=1 // pred_check
      _
    $region15: #{tpu_custom_call.1} parent=1 // pred_check_branch
      %36 = sbr.rel (0) target = $region17
    $region16: #{tpu_custom_call.1} parent=1 // pred_region
      %37 = dma.done [#allocation4], 256
    $region17: #{tpu_custom_call.1} parent=1 // pred_fallthru
      _
    %38 = vsyncpa [#allocation3], 1
    %39 = vsyncpa [#allocation4], 1

</llo_original>
